<compile_context>
chip_gen: v5e
topology: v5e:2x2
jax: 0.10.0
libtpu: 0.0.40
codegen_flags: <defaults>
</compile_context>

<pallas_src>
import functools

import numpy as np
import jax
import jax.numpy as jnp
from jax.experimental import pallas as pl
from jax.experimental.pallas import tpu as pltpu

# ---------------------------------------------------------------------------
# Constants (match FocalLoss / SetCriterion defaults)
# ---------------------------------------------------------------------------
ALPHA = 0.25
GAMMA = 2.0            # fixed at 2.0 (FocalLoss default) -> implemented as square
NUM_CLASSES = 5        # "helmet detection with 5 classes" (+1 no-object class)
EOS_COEF = 0.1         # registered buffer `empty_weight`; unused in forward
WEIGHT_DICT = {"loss_ce": 1.0, "loss_bbox": 5.0, "loss_giou": 2.0}

LANES = 128            # TPU lane width
MAX_M = 128            # fixed capacity for matched boxes (padded + masked)


# ---------------------------------------------------------------------------
# Fused Pallas kernel: focal CE + L1 + GIoU  ->  SMEM vector of 3 scalars
#   m_ref        : SMEM (1,)   int32   number of valid matched boxes
#   logits_ref   : VMEM (C, N_pad)     f32   classes on sublanes, queries on lanes
#   tgt_ref      : VMEM (1, N_pad)     int32 target class per query
#   src_ref      : VMEM (4, MAX_M)     f32   matched predicted boxes (cx,cy,w,h rows)
#   tgtbox_ref   : VMEM (4, MAX_M)     f32   matched target boxes
#   out_ref      : SMEM (3,)           f32   [loss_ce, loss_bbox, loss_giou]
# ---------------------------------------------------------------------------
def _fused_loss_kernel(m_ref, logits_ref, tgt_ref, src_ref, tgtbox_ref, out_ref,
                       *, n_valid):
    # ---------------- focal classification loss ----------------
    logits = logits_ref[...]                        # [C, N_pad] f32
    tgt = tgt_ref[...]                              # [1, N_pad] int32
    C, n_pad = logits.shape

    # class-axis max / logsumexp unrolled over the small static sublane rows
    row_max = logits[0:1, :]
    for c in range(1, C):
        row_max = jnp.maximum(row_max, logits[c:c + 1, :])

    exp_sum = jnp.zeros_like(row_max)
    tgt_logit = jnp.zeros_like(row_max)
    for c in range(C):
        row = logits[c:c + 1, :]
        exp_sum = exp_sum + jnp.exp(row - row_max)
        tgt_logit = tgt_logit + jnp.where(tgt == c, row, 0.0)

    lse = row_max + jnp.log(exp_sum)                # [1, N_pad]
    tgt_logp = tgt_logit - lse                      # log p(target)
    ce = -tgt_logp                                  # cross_entropy, reduction='none'
    p = jnp.exp(tgt_logp)                           # == exp(-ce), single EUP exp reuse
    omp = 1.0 - p
    focal = ALPHA * omp * omp * ce                  # (1-p)**gamma with gamma == 2.0

    n_lane = jax.lax.broadcasted_iota(jnp.int32, (1, n_pad), 1)
    n_mask = n_lane < n_valid                       # n_valid is a compile-time constant
    inv_n = 1.0 / float(n_valid)                    # compile-time reciprocal
    loss_ce = jnp.sum(jnp.where(n_mask, focal, 0.0)) * inv_n

    # ---------------- box losses (masked over valid matches) ----------------
    m = m_ref[0]                                    # dynamic valid-match count
    src = src_ref[...]                              # [4, MAX_M]
    tb = tgtbox_ref[...]                            # [4, MAX_M]
    m_pad = src.shape[1]

    b_lane = jax.lax.broadcasted_iota(jnp.int32, (1, m_pad), 1)
    b_mask = b_lane < m                             # [1, MAX_M]
    m_f = jnp.maximum(m, 1).astype(jnp.float32)
    inv_m = 1.0 / m_f

    # L1 (nn.L1Loss default: mean over M*4 elements)
    diff = jnp.abs(src - tb)                        # [4, MAX_M]
    diff = jnp.where(b_mask, diff, 0.0)             # mask broadcasts over sublanes
    loss_l1 = jnp.sum(diff) * (inv_m * 0.25)

    # GIoU
    pcx, pcy, pw, ph = src[0:1, :], src[1:2, :], src[2:3, :], src[3:4, :]
    tcx, tcy, tw, th = tb[0:1, :], tb[1:2, :], tb[2:3, :], tb[3:4, :]
    px1 = pcx - 0.5 * pw; py1 = pcy - 0.5 * ph
    px2 = pcx + 0.5 * pw; py2 = pcy + 0.5 * ph
    tx1 = tcx - 0.5 * tw; ty1 = tcy - 0.5 * th
    tx2 = tcx + 0.5 * tw; ty2 = tcy + 0.5 * th

    iw = jnp.maximum(jnp.minimum(px2, tx2) - jnp.maximum(px1, tx1), 0.0)
    ih = jnp.maximum(jnp.minimum(py2, ty2) - jnp.maximum(py1, ty1), 0.0)
    inter = iw * ih
    pa = (px2 - px1) * (py2 - py1)
    ta = (tx2 - tx1) * (ty2 - ty1)
    union = pa + ta - inter
    iou = inter / (union + 1e-7)

    enc = (jnp.maximum(px2, tx2) - jnp.minimum(px1, tx1)) * \
          (jnp.maximum(py2, ty2) - jnp.minimum(py1, ty1))
    giou = iou - (enc - union) / (enc + 1e-7)
    one_minus_giou = jnp.where(b_mask, 1.0 - giou, 0.0)
    loss_giou = jnp.sum(one_minus_giou) * inv_m

    out_ref[0] = loss_ce
    out_ref[1] = loss_l1
    out_ref[2] = loss_giou


def fused_losses_pallas(m_count, logits_cn, targets_1n, src_4m, tgt_4m, n_valid):
    kernel = functools.partial(_fused_loss_kernel, n_valid=n_valid)
    return pl.pallas_call(
        kernel,
        out_shape=jax.ShapeDtypeStruct((3,), jnp.float32),
        in_specs=[pl.BlockSpec(memory_space=pltpu.MemorySpace.SMEM),
                  pl.BlockSpec(memory_space=pltpu.MemorySpace.VMEM),
                  pl.BlockSpec(memory_space=pltpu.MemorySpace.VMEM),
                  pl.BlockSpec(memory_space=pltpu.MemorySpace.VMEM),
                  pl.BlockSpec(memory_space=pltpu.MemorySpace.VMEM)],
        out_specs=pl.BlockSpec(memory_space=pltpu.MemorySpace.SMEM),
    )(m_count, logits_cn, targets_1n, src_4m, tgt_4m)


# ---------------------------------------------------------------------------
# Jitted on-device glue: scatter target classes, gather matched boxes,
# re-layout lane-dense, call the fused kernel. Fixed shapes -> single compile.
# ---------------------------------------------------------------------------
@functools.partial(jax.jit, static_argnames=("num_classes",))
def _compute_losses(pred_logits, pred_boxes, flat_labels, flat_tgt_boxes,
                    m_batch_idx, m_src_idx, m_tgt_idx, num_matched, num_classes):
    B, Q, C = pred_logits.shape
    N = B * Q
    N_pad = ((N + LANES - 1) // LANES) * LANES

    # on-device scatter of matched labels (padded rows have batch_idx == B -> dropped)
    matched_labels = flat_labels[m_tgt_idx]
    target_classes = jnp.full((B, Q), num_classes, dtype=jnp.int32)
    target_classes = target_classes.at[m_batch_idx, m_src_idx].set(
        matched_labels, mode="drop")

    # lane-dense layouts: classes / coords on sublanes, N / M on the 128-lane axis
    logits_cn = jnp.transpose(pred_logits.reshape(N, C).astype(jnp.float32))  # [C, N]
    logits_cn = jnp.pad(logits_cn, ((0, 0), (0, N_pad - N)))
    tgt_1n = jnp.pad(target_classes.reshape(1, N), ((0, 0), (0, N_pad - N)))

    # on-device gather of matched boxes (clamped padded indices, masked in-kernel)
    b_clamped = jnp.clip(m_batch_idx, 0, B - 1)
    src_4m = jnp.transpose(pred_boxes[b_clamped, m_src_idx].astype(jnp.float32))   # [4, MAX_M]
    tgt_4m = jnp.transpose(flat_tgt_boxes[m_tgt_idx].astype(jnp.float32))          # [4, MAX_M]

    m_count = num_matched.astype(jnp.int32).reshape(1)
    return fused_losses_pallas(m_count, logits_cn, tgt_1n, src_4m, tgt_4m, N)


# ---------------------------------------------------------------------------
# SetCriterion.forward equivalent
# ---------------------------------------------------------------------------
def simple_matcher(outputs, targets):
    # TODO(synk): the real DETR matcher is a host-side Hungarian assignment
    # (external module passed to __init__); here a deterministic in-order
    # matching (query i <-> target i) stands in for it.
    indices = []
    for t in targets:
        n = int(np.asarray(t["labels"]).shape[0])
        indices.append((np.arange(n, dtype=np.int32), np.arange(n, dtype=np.int32)))
    return indices


def set_criterion_forward(outputs, targets, num_classes=NUM_CLASSES,
                          weight_dict=WEIGHT_DICT):
    pred_logits = outputs["pred_logits"]        # [B, Q, num_classes + 1]
    pred_boxes = outputs["pred_boxes"]          # [B, Q, 4]
    B = pred_logits.shape[0]

    indices = simple_matcher(outputs, targets)  # host-side matcher output (static shapes)

    # Flatten matcher output into fixed-size index arrays (one small H2D transfer).
    m_batch = np.full((MAX_M,), B, dtype=np.int32)   # B == out-of-bounds -> scatter drop
    m_src = np.zeros((MAX_M,), dtype=np.int32)
    m_tgt = np.zeros((MAX_M,), dtype=np.int32)
    flat_labels = np.zeros((MAX_M,), dtype=np.int32)
    flat_boxes = np.zeros((MAX_M, 4), dtype=np.float32)

    pos, offset = 0, 0
    for b in range(B):
        src_idx, tgt_idx = indices[b]
        labels_b = np.asarray(targets[b]["labels"])
        boxes_b = np.asarray(targets[b]["boxes"], dtype=np.float32)
        nb = labels_b.shape[0]
        flat_labels[offset:offset + nb] = labels_b
        flat_boxes[offset:offset + nb] = boxes_b
        k = int(src_idx.shape[0])
        if k > 0:
            m_batch[pos:pos + k] = b
            m_src[pos:pos + k] = src_idx
            m_tgt[pos:pos + k] = offset + np.asarray(tgt_idx)
        pos += k
        offset += nb
    assert pos <= MAX_M and offset <= MAX_M, "increase MAX_M"

    losses3 = _compute_losses(
        pred_logits, pred_boxes,
        jnp.asarray(flat_labels), jnp.asarray(flat_boxes),
        jnp.asarray(m_batch), jnp.asarray(m_src), jnp.asarray(m_tgt),
        jnp.asarray(np.int32(pos)), num_classes)

    losses = {"loss_ce": losses3[0], "loss_bbox": losses3[1], "loss_giou": losses3[2]}
    return {k: v * weight_dict[k] for k, v in losses.items() if k in weight_dict}


# ---------------------------------------------------------------------------
# Pure-JAX reference for a numerical sanity check
# ---------------------------------------------------------------------------
def _reference_losses(pred_logits, target_classes, src_boxes, target_boxes):
    B, Q, C = pred_logits.shape
    logits = pred_logits.reshape(B * Q, C)
    tgt = target_classes.reshape(B * Q)
    logp = jax.nn.log_softmax(logits, axis=-1)
    ce = -jnp.take_along_axis(logp, tgt[:, None], axis=-1)[:, 0]
    p = jnp.exp(-ce)
    loss_ce = jnp.mean(ALPHA * (1.0 - p) ** 2 * ce)

    loss_bbox = jnp.mean(jnp.abs(src_boxes - target_boxes))

    def to_xyxy(b):
        cx, cy, w, h = b[:, 0], b[:, 1], b[:, 2], b[:, 3]
        return jnp.stack([cx - 0.5 * w, cy - 0.5 * h, cx + 0.5 * w, cy + 0.5 * h], -1)

    pb, tb = to_xyxy(src_boxes), to_xyxy(target_boxes)
    ix1 = jnp.maximum(pb[:, 0], tb[:, 0]); iy1 = jnp.maximum(pb[:, 1], tb[:, 1])
    ix2 = jnp.minimum(pb[:, 2], tb[:, 2]); iy2 = jnp.minimum(pb[:, 3], tb[:, 3])
    inter = jnp.maximum(ix2 - ix1, 0) * jnp.maximum(iy2 - iy1, 0)
    pa = (pb[:, 2] - pb[:, 0]) * (pb[:, 3] - pb[:, 1])
    ta = (tb[:, 2] - tb[:, 0]) * (tb[:, 3] - tb[:, 1])
    union = pa + ta - inter
    iou = inter / (union + 1e-7)
    ex1 = jnp.minimum(pb[:, 0], tb[:, 0]); ey1 = jnp.minimum(pb[:, 1], tb[:, 1])
    ex2 = jnp.maximum(pb[:, 2], tb[:, 2]); ey2 = jnp.maximum(pb[:, 3], tb[:, 3])
    enc = (ex2 - ex1) * (ey2 - ey1)
    giou = iou - (enc - union) / (enc + 1e-7)
    loss_giou = jnp.mean(1.0 - giou)
    return loss_ce, loss_bbox, loss_giou


# ---------------------------------------------------------------------------
# main
# ---------------------------------------------------------------------------
if __name__ == "__main__":
    key = jax.random.PRNGKey(0)
    B, Q = 2, 8
    C = NUM_CLASSES + 1  # 6 (includes no-object class)

    k1, k2, k3, k4, k5, k6 = jax.random.split(key, 6)
    pred_logits = jax.random.normal(k1, (B, Q, C), dtype=jnp.float32)
    pred_boxes = jax.nn.sigmoid(jax.random.normal(k2, (B, Q, 4), dtype=jnp.float32))

    # synthetic targets: batch 0 has 3 objects, batch 1 has 2 objects
    targets = [
        {"labels": jax.random.randint(k3, (3,), 0, NUM_CLASSES),
         "boxes": jax.nn.sigmoid(jax.random.normal(k4, (3, 4), dtype=jnp.float32))},
        {"labels": jax.random.randint(k5, (2,), 0, NUM_CLASSES),
         "boxes": jax.nn.sigmoid(jax.random.normal(k6, (2, 4), dtype=jnp.float32))},
    ]

    outputs = {"pred_logits": pred_logits, "pred_boxes": pred_boxes}

    losses = set_criterion_forward(outputs, targets)
    losses = {k: jax.block_until_ready(v) for k, v in losses.items()}

    # reference check (same deterministic matching / target construction)
    indices = simple_matcher(outputs, targets)
    tc = np.full((B, Q), NUM_CLASSES, dtype=np.int32)
    src_l, tgt_l = [], []
    for b in range(B):
        s, t = indices[b]
        tc[b, s] = np.asarray(targets[b]["labels"])[t]
        src_l.append(pred_boxes[b][jnp.asarray(s)])
        tgt_l.append(targets[b]["boxes"][jnp.asarray(t)])
    ref_ce, ref_bbox, ref_giou = _reference_losses(
        pred_logits, jnp.asarray(tc),
        jnp.concatenate(src_l, 0), jnp.concatenate(tgt_l, 0))

    np.testing.assert_allclose(np.asarray(losses["loss_ce"]),
                               np.asarray(ref_ce) * WEIGHT_DICT["loss_ce"],
                               rtol=1e-3, atol=1e-4)
    np.testing.assert_allclose(np.asarray(losses["loss_bbox"]),
                               np.asarray(ref_bbox) * WEIGHT_DICT["loss_bbox"],
                               rtol=1e-3, atol=1e-4)
    np.testing.assert_allclose(np.asarray(losses["loss_giou"]),
                               np.asarray(ref_giou) * WEIGHT_DICT["loss_giou"],
                               rtol=1e-3, atol=1e-4)

    print("KERNEL_OK")
</pallas_src>

<mosaic_0001>
module attributes {stable_mosaic.version = 11 : i64} {
  func.func @_fused_loss_kernel(%arg0: memref<1xi32, #tpu.memory_space<smem>>, %arg1: memref<6x128xf32, #tpu.memory_space<vmem>>, %arg2: memref<1x128xi32, #tpu.memory_space<vmem>>, %arg3: memref<4x128xf32, #tpu.memory_space<vmem>>, %arg4: memref<4x128xf32, #tpu.memory_space<vmem>>, %arg5: memref<3xf32, #tpu.memory_space<smem>>) attributes {dimension_semantics = [], scalar_prefetch = 0 : i64, scratch_operands = 0 : i64, tpu.core_type = #tpu.core_type<tc>} {
    %c0 = arith.constant 0 : index
    %c0_0 = arith.constant 0 : index
    %0 = vector.load %arg1[%c0, %c0_0] : memref<6x128xf32, #tpu.memory_space<vmem>>, vector<6x128xf32>
    %c0_1 = arith.constant 0 : index
    %c0_2 = arith.constant 0 : index
    %1 = vector.load %arg2[%c0_1, %c0_2] : memref<1x128xi32, #tpu.memory_space<vmem>>, vector<1x128xi32>
    %2 = vector.extract_strided_slice %0 {offsets = [0, 0], sizes = [1, 128], strides = [1, 1]} : vector<6x128xf32> to vector<1x128xf32>
    %3 = vector.extract_strided_slice %0 {offsets = [1, 0], sizes = [1, 128], strides = [1, 1]} : vector<6x128xf32> to vector<1x128xf32>
    %4 = arith.maximumf %2, %3 : vector<1x128xf32>
    %5 = vector.extract_strided_slice %0 {offsets = [2, 0], sizes = [1, 128], strides = [1, 1]} : vector<6x128xf32> to vector<1x128xf32>
    %6 = arith.maximumf %4, %5 : vector<1x128xf32>
    %7 = vector.extract_strided_slice %0 {offsets = [3, 0], sizes = [1, 128], strides = [1, 1]} : vector<6x128xf32> to vector<1x128xf32>
    %8 = arith.maximumf %6, %7 : vector<1x128xf32>
    %9 = vector.extract_strided_slice %0 {offsets = [4, 0], sizes = [1, 128], strides = [1, 1]} : vector<6x128xf32> to vector<1x128xf32>
    %10 = arith.maximumf %8, %9 : vector<1x128xf32>
    %11 = vector.extract_strided_slice %0 {offsets = [5, 0], sizes = [1, 128], strides = [1, 1]} : vector<6x128xf32> to vector<1x128xf32>
    %12 = arith.maximumf %10, %11 : vector<1x128xf32>
    %cst = arith.constant 0.000000e+00 : f32
    %13 = vector.broadcast %cst : f32 to vector<1x128xf32>
    %cst_3 = arith.constant 0.000000e+00 : f32
    %14 = vector.broadcast %cst_3 : f32 to vector<1x128xf32>
    %15 = vector.extract_strided_slice %0 {offsets = [0, 0], sizes = [1, 128], strides = [1, 1]} : vector<6x128xf32> to vector<1x128xf32>
    %16 = arith.subf %15, %12 : vector<1x128xf32>
    %17 = math.exp %16 : vector<1x128xf32>
    %18 = arith.addf %13, %17 : vector<1x128xf32>
    %c0_i32 = arith.constant 0 : i32
    %19 = vector.broadcast %c0_i32 : i32 to vector<1x128xi32>
    %20 = arith.cmpi eq, %1, %19 : vector<1x128xi32>
    %cst_4 = arith.constant 0.000000e+00 : f32
    %21 = vector.broadcast %cst_4 : f32 to vector<1x128xf32>
    %22 = arith.select %20, %15, %21 : vector<1x128xi1>, vector<1x128xf32>
    %23 = arith.addf %14, %22 : vector<1x128xf32>
    %24 = vector.extract_strided_slice %0 {offsets = [1, 0], sizes = [1, 128], strides = [1, 1]} : vector<6x128xf32> to vector<1x128xf32>
    %25 = arith.subf %24, %12 : vector<1x128xf32>
    %26 = math.exp %25 : vector<1x128xf32>
    %27 = arith.addf %18, %26 : vector<1x128xf32>
    %c1_i32 = arith.constant 1 : i32
    %28 = vector.broadcast %c1_i32 : i32 to vector<1x128xi32>
    %29 = arith.cmpi eq, %1, %28 : vector<1x128xi32>
    %cst_5 = arith.constant 0.000000e+00 : f32
    %30 = vector.broadcast %cst_5 : f32 to vector<1x128xf32>
    %31 = arith.select %29, %24, %30 : vector<1x128xi1>, vector<1x128xf32>
    %32 = arith.addf %23, %31 : vector<1x128xf32>
    %33 = vector.extract_strided_slice %0 {offsets = [2, 0], sizes = [1, 128], strides = [1, 1]} : vector<6x128xf32> to vector<1x128xf32>
    %34 = arith.subf %33, %12 : vector<1x128xf32>
    %35 = math.exp %34 : vector<1x128xf32>
    %36 = arith.addf %27, %35 : vector<1x128xf32>
    %c2_i32 = arith.constant 2 : i32
    %37 = vector.broadcast %c2_i32 : i32 to vector<1x128xi32>
    %38 = arith.cmpi eq, %1, %37 : vector<1x128xi32>
    %cst_6 = arith.constant 0.000000e+00 : f32
    %39 = vector.broadcast %cst_6 : f32 to vector<1x128xf32>
    %40 = arith.select %38, %33, %39 : vector<1x128xi1>, vector<1x128xf32>
    %41 = arith.addf %32, %40 : vector<1x128xf32>
    %42 = vector.extract_strided_slice %0 {offsets = [3, 0], sizes = [1, 128], strides = [1, 1]} : vector<6x128xf32> to vector<1x128xf32>
    %43 = arith.subf %42, %12 : vector<1x128xf32>
    %44 = math.exp %43 : vector<1x128xf32>
    %45 = arith.addf %36, %44 : vector<1x128xf32>
    %c3_i32 = arith.constant 3 : i32
    %46 = vector.broadcast %c3_i32 : i32 to vector<1x128xi32>
    %47 = arith.cmpi eq, %1, %46 : vector<1x128xi32>
    %cst_7 = arith.constant 0.000000e+00 : f32
    %48 = vector.broadcast %cst_7 : f32 to vector<1x128xf32>
    %49 = arith.select %47, %42, %48 : vector<1x128xi1>, vector<1x128xf32>
    %50 = arith.addf %41, %49 : vector<1x128xf32>
    %51 = vector.extract_strided_slice %0 {offsets = [4, 0], sizes = [1, 128], strides = [1, 1]} : vector<6x128xf32> to vector<1x128xf32>
    %52 = arith.subf %51, %12 : vector<1x128xf32>
    %53 = math.exp %52 : vector<1x128xf32>
    %54 = arith.addf %45, %53 : vector<1x128xf32>
    %c4_i32 = arith.constant 4 : i32
    %55 = vector.broadcast %c4_i32 : i32 to vector<1x128xi32>
    %56 = arith.cmpi eq, %1, %55 : vector<1x128xi32>
    %cst_8 = arith.constant 0.000000e+00 : f32
    %57 = vector.broadcast %cst_8 : f32 to vector<1x128xf32>
    %58 = arith.select %56, %51, %57 : vector<1x128xi1>, vector<1x128xf32>
    %59 = arith.addf %50, %58 : vector<1x128xf32>
    %60 = vector.extract_strided_slice %0 {offsets = [5, 0], sizes = [1, 128], strides = [1, 1]} : vector<6x128xf32> to vector<1x128xf32>
    %61 = arith.subf %60, %12 : vector<1x128xf32>
    %62 = math.exp %61 : vector<1x128xf32>
    %63 = arith.addf %54, %62 : vector<1x128xf32>
    %c5_i32 = arith.constant 5 : i32
    %64 = vector.broadcast %c5_i32 : i32 to vector<1x128xi32>
    %65 = arith.cmpi eq, %1, %64 : vector<1x128xi32>
    %cst_9 = arith.constant 0.000000e+00 : f32
    %66 = vector.broadcast %cst_9 : f32 to vector<1x128xf32>
    %67 = arith.select %65, %60, %66 : vector<1x128xi1>, vector<1x128xf32>
    %68 = arith.addf %59, %67 : vector<1x128xf32>
    %69 = math.log %63 : vector<1x128xf32>
    %70 = arith.addf %12, %69 : vector<1x128xf32>
    %71 = arith.subf %68, %70 : vector<1x128xf32>
    %cst_10 = arith.constant 0.000000e+00 : f32
    %72 = vector.broadcast %cst_10 : f32 to vector<1x128xf32>
    %73 = arith.subf %72, %71 : vector<1x128xf32>
    %74 = math.exp %71 : vector<1x128xf32>
    %cst_11 = arith.constant 1.000000e+00 : f32
    %75 = vector.broadcast %cst_11 : f32 to vector<1x128xf32>
    %76 = arith.subf %75, %74 : vector<1x128xf32>
    %cst_12 = arith.constant 2.500000e-01 : f32
    %77 = vector.broadcast %cst_12 : f32 to vector<1x128xf32>
    %78 = arith.mulf %77, %76 : vector<1x128xf32>
    %79 = arith.mulf %78, %76 : vector<1x128xf32>
    %80 = arith.mulf %79, %73 : vector<1x128xf32>
    %81 = tpu.iota {dimensions = array<i32: 1>} : vector<1x128xi32>
    %c16_i32 = arith.constant 16 : i32
    %82 = vector.broadcast %c16_i32 : i32 to vector<1x128xi32>
    %83 = arith.cmpi slt, %81, %82 : vector<1x128xi32>
    %cst_13 = arith.constant 0.000000e+00 : f32
    %84 = vector.broadcast %cst_13 : f32 to vector<1x128xf32>
    %85 = arith.select %83, %80, %84 : vector<1x128xi1>, vector<1x128xf32>
    %86 = vector.shape_cast %85 : vector<1x128xf32> to vector<1x1x128xf32>
    %cst_14 = arith.constant dense<0.000000e+00> : vector<1xf32>
    %87 = vector.multi_reduction <add>, %86, %cst_14 [1, 2] : vector<1x1x128xf32> to vector<1xf32>
    %88 = vector.shape_cast %87 : vector<1xf32> to vector<1x1x1xf32>
    %89 = vector.extract %88[0, 0, 0] : f32 from vector<1x1x1xf32>
    %cst_15 = arith.constant 6.250000e-02 : f32
    %90 = arith.mulf %89, %cst_15 : f32
    %c0_16 = arith.constant 0 : index
    %91 = memref.load %arg0[%c0_16] : memref<1xi32, #tpu.memory_space<smem>>
    %c0_17 = arith.constant 0 : index
    %c0_18 = arith.constant 0 : index
    %92 = vector.load %arg3[%c0_17, %c0_18] : memref<4x128xf32, #tpu.memory_space<vmem>>, vector<4x128xf32>
    %c0_19 = arith.constant 0 : index
    %c0_20 = arith.constant 0 : index
    %93 = vector.load %arg4[%c0_19, %c0_20] : memref<4x128xf32, #tpu.memory_space<vmem>>, vector<4x128xf32>
    %94 = tpu.iota {dimensions = array<i32: 1>} : vector<1x128xi32>
    %95 = vector.broadcast %91 : i32 to vector<1x128xi32>
    %96 = arith.cmpi slt, %94, %95 : vector<1x128xi32>
    %c1_i32_21 = arith.constant 1 : i32
    %97 = arith.maxsi %91, %c1_i32_21 : i32
    %98 = arith.sitofp %97 : i32 to f32
    %cst_22 = arith.constant 1.000000e+00 : f32
    %99 = arith.divf %cst_22, %98 : f32
    %100 = arith.subf %92, %93 : vector<4x128xf32>
    %101 = math.absf %100 : vector<4x128xf32>
    %cst_23 = arith.constant 0.000000e+00 : f32
    %102 = vector.shape_cast %96 : vector<1x128xi1> to vector<1x128xi1>
    %103 = vector.broadcast %102 : vector<1x128xi1> to vector<4x128xi1>
    %104 = vector.broadcast %cst_23 : f32 to vector<4x128xf32>
    %105 = arith.select %103, %101, %104 : vector<4x128xi1>, vector<4x128xf32>
    %106 = vector.shape_cast %105 : vector<4x128xf32> to vector<1x4x128xf32>
    %cst_24 = arith.constant dense<0.000000e+00> : vector<1xf32>
    %107 = vector.multi_reduction <add>, %106, %cst_24 [1, 2] : vector<1x4x128xf32> to vector<1xf32>
    %108 = vector.shape_cast %107 : vector<1xf32> to vector<1x1x1xf32>
    %109 = vector.extract %108[0, 0, 0] : f32 from vector<1x1x1xf32>
    %cst_25 = arith.constant 2.500000e-01 : f32
    %110 = arith.mulf %99, %cst_25 : f32
    %111 = arith.mulf %109, %110 : f32
    %112 = vector.extract_strided_slice %92 {offsets = [0, 0], sizes = [1, 128], strides = [1, 1]} : vector<4x128xf32> to vector<1x128xf32>
    %113 = vector.extract_strided_slice %92 {offsets = [1, 0], sizes = [1, 128], strides = [1, 1]} : vector<4x128xf32> to vector<1x128xf32>
    %114 = vector.extract_strided_slice %92 {offsets = [2, 0], sizes = [1, 128], strides = [1, 1]} : vector<4x128xf32> to vector<1x128xf32>
    %115 = vector.extract_strided_slice %92 {offsets = [3, 0], sizes = [1, 128], strides = [1, 1]} : vector<4x128xf32> to vector<1x128xf32>
    %116 = vector.extract_strided_slice %93 {offsets = [0, 0], sizes = [1, 128], strides = [1, 1]} : vector<4x128xf32> to vector<1x128xf32>
    %117 = vector.extract_strided_slice %93 {offsets = [1, 0], sizes = [1, 128], strides = [1, 1]} : vector<4x128xf32> to vector<1x128xf32>
    %118 = vector.extract_strided_slice %93 {offsets = [2, 0], sizes = [1, 128], strides = [1, 1]} : vector<4x128xf32> to vector<1x128xf32>
    %119 = vector.extract_strided_slice %93 {offsets = [3, 0], sizes = [1, 128], strides = [1, 1]} : vector<4x128xf32> to vector<1x128xf32>
    %cst_26 = arith.constant 5.000000e-01 : f32
    %120 = vector.broadcast %cst_26 : f32 to vector<1x128xf32>
    %121 = arith.mulf %120, %114 : vector<1x128xf32>
    %122 = arith.subf %112, %121 : vector<1x128xf32>
    %cst_27 = arith.constant 5.000000e-01 : f32
    %123 = vector.broadcast %cst_27 : f32 to vector<1x128xf32>
    %124 = arith.mulf %123, %115 : vector<1x128xf32>
    %125 = arith.subf %113, %124 : vector<1x128xf32>
    %cst_28 = arith.constant 5.000000e-01 : f32
    %126 = vector.broadcast %cst_28 : f32 to vector<1x128xf32>
    %127 = arith.mulf %126, %114 : vector<1x128xf32>
    %128 = arith.addf %112, %127 : vector<1x128xf32>
    %cst_29 = arith.constant 5.000000e-01 : f32
    %129 = vector.broadcast %cst_29 : f32 to vector<1x128xf32>
    %130 = arith.mulf %129, %115 : vector<1x128xf32>
    %131 = arith.addf %113, %130 : vector<1x128xf32>
    %cst_30 = arith.constant 5.000000e-01 : f32
    %132 = vector.broadcast %cst_30 : f32 to vector<1x128xf32>
    %133 = arith.mulf %132, %118 : vector<1x128xf32>
    %134 = arith.subf %116, %133 : vector<1x128xf32>
    %cst_31 = arith.constant 5.000000e-01 : f32
    %135 = vector.broadcast %cst_31 : f32 to vector<1x128xf32>
    %136 = arith.mulf %135, %119 : vector<1x128xf32>
    %137 = arith.subf %117, %136 : vector<1x128xf32>
    %cst_32 = arith.constant 5.000000e-01 : f32
    %138 = vector.broadcast %cst_32 : f32 to vector<1x128xf32>
    %139 = arith.mulf %138, %118 : vector<1x128xf32>
    %140 = arith.addf %116, %139 : vector<1x128xf32>
    %cst_33 = arith.constant 5.000000e-01 : f32
    %141 = vector.broadcast %cst_33 : f32 to vector<1x128xf32>
    %142 = arith.mulf %141, %119 : vector<1x128xf32>
    %143 = arith.addf %117, %142 : vector<1x128xf32>
    %144 = arith.minimumf %128, %140 : vector<1x128xf32>
    %145 = arith.maximumf %122, %134 : vector<1x128xf32>
    %146 = arith.subf %144, %145 : vector<1x128xf32>
    %cst_34 = arith.constant 0.000000e+00 : f32
    %147 = vector.broadcast %cst_34 : f32 to vector<1x128xf32>
    %148 = arith.maximumf %146, %147 : vector<1x128xf32>
    %149 = arith.minimumf %131, %143 : vector<1x128xf32>
    %150 = arith.maximumf %125, %137 : vector<1x128xf32>
    %151 = arith.subf %149, %150 : vector<1x128xf32>
    %cst_35 = arith.constant 0.000000e+00 : f32
    %152 = vector.broadcast %cst_35 : f32 to vector<1x128xf32>
    %153 = arith.maximumf %151, %152 : vector<1x128xf32>
    %154 = arith.mulf %148, %153 : vector<1x128xf32>
    %155 = arith.subf %128, %122 : vector<1x128xf32>
    %156 = arith.subf %131, %125 : vector<1x128xf32>
    %157 = arith.mulf %155, %156 : vector<1x128xf32>
    %158 = arith.subf %140, %134 : vector<1x128xf32>
    %159 = arith.subf %143, %137 : vector<1x128xf32>
    %160 = arith.mulf %158, %159 : vector<1x128xf32>
    %161 = arith.addf %157, %160 : vector<1x128xf32>
    %162 = arith.subf %161, %154 : vector<1x128xf32>
    %cst_36 = arith.constant 1.000000e-07 : f32
    %163 = vector.broadcast %cst_36 : f32 to vector<1x128xf32>
    %164 = arith.addf %162, %163 : vector<1x128xf32>
    %165 = arith.divf %154, %164 : vector<1x128xf32>
    %166 = arith.maximumf %128, %140 : vector<1x128xf32>
    %167 = arith.minimumf %122, %134 : vector<1x128xf32>
    %168 = arith.subf %166, %167 : vector<1x128xf32>
    %169 = arith.maximumf %131, %143 : vector<1x128xf32>
    %170 = arith.minimumf %125, %137 : vector<1x128xf32>
    %171 = arith.subf %169, %170 : vector<1x128xf32>
    %172 = arith.mulf %168, %171 : vector<1x128xf32>
    %173 = arith.subf %172, %162 : vector<1x128xf32>
    %cst_37 = arith.constant 1.000000e-07 : f32
    %174 = vector.broadcast %cst_37 : f32 to vector<1x128xf32>
    %175 = arith.addf %172, %174 : vector<1x128xf32>
    %176 = arith.divf %173, %175 : vector<1x128xf32>
    %177 = arith.subf %165, %176 : vector<1x128xf32>
    %cst_38 = arith.constant 1.000000e+00 : f32
    %178 = vector.broadcast %cst_38 : f32 to vector<1x128xf32>
    %179 = arith.subf %178, %177 : vector<1x128xf32>
    %cst_39 = arith.constant 0.000000e+00 : f32
    %180 = vector.broadcast %cst_39 : f32 to vector<1x128xf32>
    %181 = arith.select %96, %179, %180 : vector<1x128xi1>, vector<1x128xf32>
    %182 = vector.shape_cast %181 : vector<1x128xf32> to vector<1x1x128xf32>
    %cst_40 = arith.constant dense<0.000000e+00> : vector<1xf32>
    %183 = vector.multi_reduction <add>, %182, %cst_40 [1, 2] : vector<1x1x128xf32> to vector<1xf32>
    %184 = vector.shape_cast %183 : vector<1xf32> to vector<1x1x1xf32>
    %185 = vector.extract %184[0, 0, 0] : f32 from vector<1x1x1xf32>
    %186 = arith.mulf %185, %99 : f32
    %c0_41 = arith.constant 0 : index
    %187 = memref.load %arg5[%c0_41] : memref<3xf32, #tpu.memory_space<smem>>
    memref.store %90, %arg5[%c0_41] : memref<3xf32, #tpu.memory_space<smem>>
    %c1 = arith.constant 1 : index
    %188 = memref.load %arg5[%c1] : memref<3xf32, #tpu.memory_space<smem>>
    memref.store %111, %arg5[%c1] : memref<3xf32, #tpu.memory_space<smem>>
    %c2 = arith.constant 2 : index
    %189 = memref.load %arg5[%c2] : memref<3xf32, #tpu.memory_space<smem>>
    memref.store %186, %arg5[%c2] : memref<3xf32, #tpu.memory_space<smem>>
    return
  }
}

</mosaic_0001>

<llo_original>
// kernel: _compute_losses.1
$region0: #{_compute_losses.1}
  #allocation0 [shape = 'u32[]', space=smem, size = 0x4, offset = 0x4, fixed_abs, tag = 'smem constant byte address 0x4 - core index']
  #allocation1 [shape = 'u32[72,128]{1,0:T(1,128)}', space=vmem, size = 0x9000, scoped, tag = 'internal scratch']
  #allocation2 [shape = 's32[1]{0:T(128)S(6)}', space=smem, size = 0x200, scoped, tag = 'scoped memory for _compute_losses.1']
  %s0 = inlined_call_operand.<no memory space> [shape: s32[1], index: 0, kind: input, shape index: {}]
  %s1 = inlined_call_operand.vmem [shape: f32[6,128], index: 1, kind: input, shape index: {}]
  %s2 = inlined_call_operand.vmem [shape: s32[1,128], index: 2, kind: input, shape index: {}]
  %s3 = inlined_call_operand.vmem [shape: f32[4,128], index: 3, kind: input, shape index: {}]
  %s4 = inlined_call_operand.vmem [shape: f32[4,128], index: 4, kind: input, shape index: {}]
  %s5 = inlined_call_operand.hbm [shape: f32[3], index: 5, kind: output, shape index: {}]
  %s6 = sld [smem:[#allocation0]]
  $region30: #{_compute_losses.1} parent=0
    _
  %s8 = ssub.s32 1, %s6
  %s9 = scalar_select 0, %s8, %s6
  %10 = sst [smem:[#allocation2]] %s0
  $region1: #{_compute_losses.1} parent=0
    #allocation3 [shape = 'u8[512]{0}', space=smem, size = 0x200, scoped, tag = 'output window, operand 0, single buffered']
    #allocation4 [shape = 's32[1]{0}', space=sflag, size = 0x4, scoped, tag = 'scoped memory for _compute_losses.1']
    %11 = vsyncpa [#allocation4], 0
    // Predicated region
    $region2: #{_compute_losses.1} parent=1 // pred_check
      _
    $region3: #{_compute_losses.1} parent=1 // pred_check_branch
      %13 = sbr.rel (0) target = $region5
    $region4: #{_compute_losses.1} parent=1 // pred_region
      _
    $region5: #{_compute_losses.1} parent=1 // pred_fallthru
      _
    // Predicated region
    $region6: #{_compute_losses.1} parent=1 // pred_check
      _
    $region7: #{_compute_losses.1} parent=1 // pred_check_branch
      %15 = sbr.rel (0) target = $region9
    $region8: #{_compute_losses.1} parent=1 // pred_region
      _
    $region9: #{_compute_losses.1} parent=1 // pred_fallthru
      _
    // Predicated region
    $region10: #{_compute_losses.1} parent=1 // pred_check
      _
    $region11: #{_compute_losses.1} parent=1 // pred_check_branch
      %17 = sbr.rel (0) target = $region13
    $region12: #{_compute_losses.1} parent=1 // pred_region
      _
    $region13: #{_compute_losses.1} parent=1 // pred_fallthru
      _
    // Predicated region
    $region14: #{_compute_losses.1} parent=1 // pred_check
      _
    $region15: #{_compute_losses.1} parent=1 // pred_check_branch
      %19 = sbr.rel (0) target = $region17
    $region16: #{_compute_losses.1} parent=1 // pred_region
      _
    $region17: #{_compute_losses.1} parent=1 // pred_fallthru
      _
    // Predicated region
    $region18: #{_compute_losses.1} parent=1 // pred_check
      _
    $region19: #{_compute_losses.1} parent=1 // pred_check_branch
      %21 = sbr.rel (0) target = $region21
    $region20: #{_compute_losses.1} parent=1 // pred_region
      _
    $region21: #{_compute_losses.1} parent=1 // pred_fallthru
      _
    %v22 = vld [vmem:[%s1] sm:$0x3f]
    %v23 = vld [vmem:[%s2] sm:$0x1]
    %v25 = vrot.slane %v22, 1
    %v27 = vmax.f32 %v22, %v25
    %v28 = vrot.slane %v22, 2
    %v30 = vmax.f32 %v27, %v28
    %v31 = vrot.slane %v22, 3
    %v33 = vmax.f32 %v30, %v31
    %v34 = vrot.slane %v22, 4
    %v36 = vmax.f32 %v33, %v34
    %v37 = vrot.slane %v22, 5
    %v39 = vmax.f32 %v36, %v37
    %v40 = vsub.f32 %v22, %v39
    %v41 = vmul.f32 %v40, 1.442695
    %v42 = vpow.pop %v41
    %v43 = vadd.f32 %v42, 0.0
    %vm44 = vcmp.eq.s32.totalorder %v23, 0
    %v45 = vsel %vm44, %v22, 0.0
    %v46 = vadd.f32 %v45, 0.0
    %v48 = vrot.slane %v39, 7
    %v50 = vsub.f32 %v22, %v48
    %v51 = vmul.f32 %v50, 1.442695
    %v52 = vpow.pop %v51
    %v54 = vrot.slane %v52, 1
    %v56 = vadd.f32 %v43, %v54
    %vm57 = vcmp.eq.s32.totalorder %v23, 1
    %58 = vst [vmem:[#allocation1] sm:$0xff] %v22
    %s59 = scalar_lea.vmem [#allocation1], 1
    %v60 = vld [vmem:[%s59] ss:$9 sm:$0xff]
    %v62 = vsel %vm57, %v60, 0.0
    %v63 = vadd.f32 %v46, %v62
    %v64 = vrot.slane %v39, 6
    %v66 = vsub.f32 %v22, %v64
    %v67 = vmul.f32 %v66, 1.442695
    %v68 = vpow.pop %v67
    %v70 = vrot.slane %v68, 2
    %v72 = vadd.f32 %v56, %v70
    %vm73 = vcmp.eq.s32.totalorder %v23, 2
    %74 = vst [vmem:[#allocation1] sm:$0xff] %v22
    %s75 = scalar_lea.vmem [#allocation1], 2
    %v76 = vld [vmem:[%s75] ss:$9 sm:$0xff]
    %v78 = vsel %vm73, %v76, 0.0
    %v79 = vadd.f32 %v63, %v78
    %v80 = vrot.slane %v39, 5
    %v82 = vsub.f32 %v22, %v80
    %v83 = vmul.f32 %v82, 1.442695
    %v84 = vpow.pop %v83
    %v86 = vrot.slane %v84, 3
    %v88 = vadd.f32 %v72, %v86
    %vm89 = vcmp.eq.s32.totalorder %v23, 3
    %90 = vst [vmem:[#allocation1] sm:$0xff] %v22
    %s91 = scalar_lea.vmem [#allocation1], 3
    %v92 = vld [vmem:[%s91] ss:$9 sm:$0xff]
    %v94 = vsel %vm89, %v92, 0.0
    %v95 = vadd.f32 %v79, %v94
    %v96 = vrot.slane %v39, 4
    %v98 = vsub.f32 %v22, %v96
    %v99 = vmul.f32 %v98, 1.442695
    %v100 = vpow.pop %v99
    %v102 = vrot.slane %v100, 4
    %v104 = vadd.f32 %v88, %v102
    %vm105 = vcmp.eq.s32.totalorder %v23, 4
    %106 = vst [vmem:[#allocation1] sm:$0xff] %v22
    %s107 = scalar_lea.vmem [#allocation1], 4
    %v108 = vld [vmem:[%s107] ss:$9 sm:$0xff]
    %v110 = vsel %vm105, %v108, 0.0
    %v111 = vadd.f32 %v95, %v110
    %v112 = vrot.slane %v39, 3
    %v114 = vsub.f32 %v22, %v112
    %v115 = vmul.f32 %v114, 1.442695
    %v116 = vpow.pop %v115
    %v118 = vrot.slane %v116, 5
    %v120 = vadd.f32 %v104, %v118
    %vm121 = vcmp.eq.s32.totalorder %v23, 5
    %122 = vst [vmem:[#allocation1] sm:$0xff] %v22
    %s123 = scalar_lea.vmem [#allocation1], 5
    %v124 = vld [vmem:[%s123] ss:$9 sm:$0xff]
    %v126 = vsel %vm121, %v124, 0.0
    %v127 = vadd.f32 %v111, %v126
    %v128 = vlog2.pop %v120
    %v129 = vmul.f32 %v128, 0.6931472
    %v130 = vadd.f32 %v39, %v129
    %v131 = vsub.f32 %v127, %v130
    %v132 = vsub.f32 0.0, %v131
    %v133 = vmul.f32 %v131, 1.442695
    %v134 = vpow.pop %v133
    %v135 = vsub.f32 1.0, %v134
    %v136 = vmul.f32 %v135, 0.25
    %v137 = vmul.f32 %v136, %v135
    %v138 = vmul.f32 %v137, %v132
    %v139 = vlaneseq
    %v140 = vand.u32 %v139, 127
    %vm141 = vcmp.lt.s32.totalorder %v140, 16
    %v142 = vsel %vm141, %v138, 0.0
    %vm143 = vcmask 1040384
    %v144 = vsel %vm143, %v142, 0.0
    %145 = vadd.xlane.f32.xlu0 %v144
    %v146 = vpop.xlane.xlu0 %145
    %v147 = vrot.slane %v146, 4
    %v148 = vadd.f32 %v146, %v147
    %v149 = vrot.slane %v148, 2
    %v150 = vadd.f32 %v148, %v149
    %v151 = vrot.slane %v150, 1
    %v152 = vadd.f32 %v150, %v151
    %s153 = vtos %v152
    %s154 = smul.f32 %s153, 0.0625
    %s155 = sld [smem:[#allocation2]]
    %v156 = vld [vmem:[%s3] sm:$0xf]
    %v157 = vld [vmem:[%s4] sm:$0xf]
    %v158 = vstv %s155
    %vm159 = vcmp.lt.s32.totalorder %v140, %v158
    %p160 = scmp.gt.s32.totalorder %s155, 1
    %s161 = scalar_select %p160, %s155, 1
    %s162 = scvt.s32.f32 %s161
    %v163 = vstv %s162
    %v164 = vrcp.pop %v163
    %v165 = vmul.f32 %v163, %v164
    %v166 = vsub.f32 1.0, %v165
    %v167 = vmul.f32 %v164, %v166
    %v168 = vadd.f32 %v164, %v167
    %vm169 = vweird.f32 %v163
    %vm170 = vweird.f32 %v164
    %vm171 = vmor %vm169, %vm170
    %v172 = vsel %vm171, %v164, %v168
    %v173 = vand.u32 2147483647, %v163
    %vm174 = vcmp.eq.f32.partialorder %v173, 8.507059e+37
    %v175 = vand.u32 %v163, 2147483648
    %v176 = vor.u32 1.1754944e-38, %v175
    %v177 = vsel %vm174, %v176, %v172
    %s178 = vtos %v177
    %v179 = vsub.f32 %v156, %v157
    %v180 = vand.u32 2147483647, %v179
    %v181 = vsel %vm159, 1, 0
    %vm182 = vcmp.eq.s32.totalorder %v181, 1
    %v183 = vsel %vm182, %v180, 0.0
    %vm184 = vcmask 1043456
    %v185 = vsel %vm184, %v183, 0.0
    %186 = vadd.xlane.f32.xlu0 %v185
    %v187 = vpop.xlane.xlu0 %186
    %v188 = vrot.slane %v187, 4
    %v189 = vadd.f32 %v187, %v188
    %v190 = vrot.slane %v189, 2
    %v191 = vadd.f32 %v189, %v190
    %v192 = vrot.slane %v191, 1
    %v193 = vadd.f32 %v191, %v192
    %s194 = vtos %v193
    %s195 = smul.f32 %s178, 0.25
    %s196 = smul.f32 %s194, %s195
    %v197 = vmul.f32 %v156, 0.5
    %v199 = vrot.slane %v197, 2
    %v201 = vsub.f32 %v156, %v199
    %v202 = vadd.f32 %v156, %v199
    %v203 = vmul.f32 %v157, 0.5
    %v205 = vrot.slane %v203, 2
    %v207 = vsub.f32 %v157, %v205
    %v208 = vadd.f32 %v157, %v205
    %v209 = vmin.f32 %v202, %v208
    %v210 = vmax.f32 %v201, %v207
    %v211 = vsub.f32 %v209, %v210
    %v212 = vmax.f32 %v211, 0.0
    %v214 = vrot.slane %v212, 1
    %v216 = vmul.f32 %v212, %v214
    %v217 = vsub.f32 %v202, %v201
    %v219 = vrot.slane %v217, 1
    %v221 = vmul.f32 %v217, %v219
    %v222 = vsub.f32 %v208, %v207
    %v224 = vrot.slane %v222, 1
    %v226 = vmul.f32 %v222, %v224
    %v227 = vadd.f32 %v221, %v226
    %v228 = vsub.f32 %v227, %v216
    %v229 = vadd.f32 %v228, 1e-07
    %v230 = vrcp.pop %v229
    %v231 = vmul.f32 %v229, %v230
    %v232 = vsub.f32 1.0, %v231
    %v233 = vmul.f32 %v230, %v232
    %v234 = vadd.f32 %v230, %v233
    %vm235 = vweird.f32 %v229
    %vm236 = vweird.f32 %v230
    %vm237 = vmor %vm235, %vm236
    %v238 = vsel %vm237, %v230, %v234
    %v239 = vand.u32 2147483647, %v229
    %vm240 = vcmp.eq.f32.partialorder %v239, 8.507059e+37
    %v241 = vand.u32 %v229, 2147483648
    %v242 = vor.u32 1.1754944e-38, %v241
    %v243 = vsel %vm240, %v242, %v238
    %v244 = vmul.f32 %v216, %v243
    %v245 = vmax.f32 %v202, %v208
    %v246 = vmin.f32 %v201, %v207
    %v247 = vsub.f32 %v245, %v246
    %v249 = vrot.slane %v247, 1
    %v251 = vmul.f32 %v247, %v249
    %v252 = vsub.f32 %v251, %v228
    %v253 = vadd.f32 %v251, 1e-07
    %v254 = vrcp.pop %v253
    %v255 = vmul.f32 %v253, %v254
    %v256 = vsub.f32 1.0, %v255
    %v257 = vmul.f32 %v254, %v256
    %v258 = vadd.f32 %v254, %v257
    %vm259 = vweird.f32 %v253
    %vm260 = vweird.f32 %v254
    %vm261 = vmor %vm259, %vm260
    %v262 = vsel %vm261, %v254, %v258
    %v263 = vand.u32 2147483647, %v253
    %vm264 = vcmp.eq.f32.partialorder %v263, 8.507059e+37
    %v265 = vand.u32 %v253, 2147483648
    %v266 = vor.u32 1.1754944e-38, %v265
    %v267 = vsel %vm264, %v266, %v262
    %v268 = vmul.f32 %v252, %v267
    %v269 = vsub.f32 %v244, %v268
    %v270 = vsub.f32 1.0, %v269
    %v271 = vsel %vm159, %v270, 0.0
    %v272 = vsel %vm143, %v271, 0.0
    %273 = vadd.xlane.f32.xlu0 %v272
    %v274 = vpop.xlane.xlu0 %273
    %v275 = vrot.slane %v274, 4
    %v276 = vadd.f32 %v274, %v275
    %v277 = vrot.slane %v276, 2
    %v278 = vadd.f32 %v276, %v277
    %v279 = vrot.slane %v278, 1
    %v280 = vadd.f32 %v278, %v279
    %s281 = vtos %v280
    %s282 = smul.f32 %s281, %s178
    %s283 = scalar_lea.smem [#allocation3], 0
    %284 = sst [smem:[%s283]] %s154
    %s285 = scalar_lea.smem [#allocation3], 1
    %286 = sst [smem:[%s285]] %s196
    %s287 = scalar_lea.smem [#allocation3], 2
    %288 = sst [smem:[%s287]] %s282
    // Predicated region
    $region22: #{_compute_losses.1} parent=1 // pred_check
      _
    $region23: #{_compute_losses.1} parent=1 // pred_check_branch
      %290 = sbr.rel (0) target = $region25
    $region24: #{_compute_losses.1} parent=1 // pred_region
      %292 = vsyncadd [#allocation4], 0
      %s294 = sshll.u32 %s5, 4
      %s295 = int_to_ptr.hbm [resolvable:$true] %s294
      %297 = dma.smem_to_hbm [#allocation3], 16, %s295, [#allocation4]
    $region25: #{_compute_losses.1} parent=1 // pred_fallthru
      _
    // Predicated region
    $region26: #{_compute_losses.1} parent=1 // pred_check
      _
    $region27: #{_compute_losses.1} parent=1 // pred_check_branch
      %299 = sbr.rel (0) target = $region29
    $region28: #{_compute_losses.1} parent=1 // pred_region
      %301 = dma.done [#allocation4], 16
    $region29: #{_compute_losses.1} parent=1 // pred_fallthru
      _
    %302 = sfence
    %303 = vsyncpa [#allocation4], 1

</llo_original>
